<compile_context>
chip_gen: v7x
topology: tpu7x:2x2x1
jax: 0.10.0
libtpu: 0.0.40
codegen_flags: <defaults>
</compile_context>

<pallas_src>
import functools

import jax
import jax.numpy as jnp
from jax import lax
from jax.experimental import pallas as pl
from jax.experimental.pallas import tpu as pltpu


# ----------------------------- in-kernel compute -----------------------------

def _stem_head_logits(x, wfold, pbias, wc, bc):
    """Raw image tile -> classifier logits.

    x:     (Bt, C, H, W) raw (unnormalized) images
    wfold: (27, S)  conv_stem weights, rows ordered ((kh*3+kw)*C + c),
                    pre-scaled by 1 / (std_c * Ho * Wo)
    pbias: (1, S)   mean / zero-pad correction (folded at trace time)
    wc:    (S, NC)  classifier weight
    bc:    (1, NC)  classifier bias
    """
    x = x.astype(jnp.float32)
    _, _, H, W = x.shape

    # -- column (lane-axis) parity sums: kw=1 -> even cols, kw=2 -> odd cols,
    #    kw=0 -> odd cols minus the last column when W is even.
    cidx = lax.broadcasted_iota(jnp.int32, (1, 1, 1, W), 3)
    ceven = ((cidx % 2) == 0).astype(jnp.float32)
    s_all = jnp.sum(x, axis=3)                         # (Bt, C, H)
    s_ce = jnp.sum(x * ceven, axis=3)                  # even columns
    s_co = s_all - s_ce                                # odd columns
    s_c0 = s_co - x[:, :, :, W - 1] if (W % 2 == 0) else s_co
    col_sums = (s_c0, s_ce, s_co)                      # kw = 0, 1, 2

    # -- row parity sums of each column-set sum -> 9 tap sums per channel.
    ridx = lax.broadcasted_iota(jnp.int32, (1, 1, H), 2)
    reven = ((ridx % 2) == 0).astype(jnp.float32)
    taps = [[None] * 3 for _ in range(3)]              # [kh][kw] -> (Bt, C)
    for kw in range(3):
        cw = col_sums[kw]                              # (Bt, C, H)
        r_all = jnp.sum(cw, axis=2)
        r_e = jnp.sum(cw * reven, axis=2)
        r_o = r_all - r_e
        r_0 = r_o - cw[:, :, H - 1] if (H % 2 == 0) else r_o
        taps[0][kw], taps[1][kw], taps[2][kw] = r_0, r_e, r_o

    # (Bt, 27), column order ((kh*3+kw)*C + c), matching wfold rows.
    tap_mat = jnp.concatenate(
        [taps[kh][kw] for kh in range(3) for kw in range(3)], axis=1)

    pooled = jnp.dot(tap_mat, wfold, preferred_element_type=jnp.float32) + pbias
    logits = jnp.dot(pooled, wc, preferred_element_type=jnp.float32) + bc
    return logits                                      # (Bt, NC)


def _fused_infer_kernel(x_ref, wfold_ref, pbias_ref, wc_ref, bc_ref,
                        probs_ref, preds_ref):
    logits = _stem_head_logits(x_ref[...], wfold_ref[...], pbias_ref[...],
                               wc_ref[...], bc_ref[...])
    m = jnp.max(logits, axis=-1, keepdims=True)
    e = jnp.exp(logits - m)
    probs = e / jnp.sum(e, axis=-1, keepdims=True)     # exact: probs sum to 1
    probs_ref[:, 0, :] = probs

    nc = logits.shape[-1]
    cls = lax.broadcasted_iota(jnp.int32, logits.shape, 1)
    preds = jnp.min(jnp.where(logits == m, cls, nc), axis=-1, keepdims=True)
    preds_ref[:, 0, :] = preds


def _fused_train_kernel(smoothing, inv_batch, x_ref, labels_ref, wfold_ref,
                        pbias_ref, wc_ref, bc_ref, loss_ref, acc_ref):
    @pl.when(pl.program_id(0) == 0)
    def _():
        loss_ref[...] = jnp.zeros_like(loss_ref)
        acc_ref[...] = jnp.zeros_like(acc_ref)

    logits = _stem_head_logits(x_ref[...], wfold_ref[...], pbias_ref[...],
                               wc_ref[...], bc_ref[...])
    labels = labels_ref[:, 0, :]                       # (Bt, 1) int32

    m = jnp.max(logits, axis=-1, keepdims=True)
    z = logits - m
    lse = jnp.log(jnp.sum(jnp.exp(z), axis=-1, keepdims=True))
    logprobs = z - lse                                 # (Bt, NC)

    nc = logits.shape[-1]
    cls = lax.broadcasted_iota(jnp.int32, logits.shape, 1)
    onehot = (cls == labels).astype(jnp.float32)
    nll = -jnp.sum(logprobs * onehot, axis=-1, keepdims=True)    # (Bt, 1)
    smooth = -jnp.mean(logprobs, axis=-1, keepdims=True)         # (Bt, 1)
    per_ex = (1.0 - smoothing) * nll + smoothing * smooth

    preds = jnp.min(jnp.where(logits == m, cls, nc), axis=-1, keepdims=True)
    correct = (preds == labels).astype(jnp.float32)

    loss_ref[...] += jnp.sum(per_ex, keepdims=True) * inv_batch
    acc_ref[...] += jnp.sum(correct, keepdims=True) * inv_batch


# ------------------------------ host-side helpers -----------------------------

def _pick_batch_tile(batch, bytes_per_image, vmem_budget=8 * 1024 * 1024,
                     max_tile=8):
    """Largest divisor of `batch` within the VMEM budget, preferring >= 2 grid
    steps so both v7x TensorCores get work under dimension_semantics=parallel."""
    cap = int(max(1, min(max_tile, vmem_budget // max(int(bytes_per_image), 1))))
    if batch <= 1:
        return 1
    target = min(cap, max(1, batch // 2))
    for d in range(target, 0, -1):
        if batch % d == 0:
            return d
    return 1


class CLFModelPallas:
    """Pallas re-implementation of CLF_MODEL's forward pass (see TODOs above)."""

    def __init__(self, num_channel=3, num_class=12, image_mean=None,
                 image_std=None, smoothing=0.1, stem_out=24,
                 key=jax.random.PRNGKey(0)):
        self.num_channel = num_channel
        self.num_class = num_class
        self.smoothing = smoothing
        self.stem_out = stem_out
        if image_mean is None:
            image_mean = (0.0,) * num_channel
        if image_std is None:
            image_std = (1.0,) * num_channel
        self.image_mean = jnp.asarray(image_mean, jnp.float32)    # (C,)
        self.image_std = jnp.asarray(image_std, jnp.float32)      # (C,)

        k1, k2, k3 = jax.random.split(key, 3)
        # replaced conv_stem: Conv2d(num_channel, 24, 3, stride=2, pad=1, bias=False)
        self.conv_w = 0.1 * jax.random.normal(
            k1, (stem_out, num_channel, 3, 3), jnp.float32)
        # replaced classifier: Linear(in_features -> num_class), bias=True
        self.clf_w = 0.1 * jax.random.normal(k2, (stem_out, num_class), jnp.float32)
        self.clf_b = 0.1 * jax.random.normal(k3, (1, num_class), jnp.float32)

    # Trace-time folding of normalize + zero-pad + conv_stem + GAP into a
    # (27 -> stem_out) affine map over raw-image tap sums.
    def _fold_stem(self, H, W):
        C, S = self.num_channel, self.stem_out
        Ho, Wo = (H - 1) // 2 + 1, (W - 1) // 2 + 1

        def tap_count(k, n, no):          # valid output positions per tap axis
            if k == 0:
                return no - 1
            if k == 1:
                return no
            return no if n % 2 == 0 else no - 1   # k == 2

        inv_area = 1.0 / float(Ho * Wo)
        w = self.conv_w / self.image_std[None, :, None, None]     # (S, C, 3, 3)
        # rows ordered ((kh*3 + kw) * C + c)
        wfold = jnp.transpose(w, (2, 3, 1, 0)).reshape(9 * C, S) * inv_area
        counts = jnp.asarray(
            [tap_count(kh, H, Ho) * tap_count(kw, W, Wo)
             for kh in range(3) for kw in range(3)], jnp.float32)  # (9,)
        corr = jnp.repeat(counts, C) * jnp.tile(self.image_mean, 9)  # (27,)
        pbias = -(corr[None, :] @ wfold)                           # (1, S)
        return wfold, pbias

    def forward(self, images, targets=None, stacked=False):
        if not jnp.issubdtype(images.dtype, jnp.floating):
            raise TypeError(
                "Expected input images to be of floating type (in range [0, 1]), "
                f"but found type {images.dtype} instead")
        B, C, H, W = images.shape
        S, NC = self.stem_out, self.num_class
        wfold, pbias = self._fold_stem(H, W)

        img_bytes = C * H * W * images.dtype.itemsize
        Bt = _pick_batch_tile(B, img_bytes)
        num_tiles = B // Bt

        x_spec = pl.BlockSpec((Bt, C, H, W), lambda b: (b, 0, 0, 0))
        w_specs = [pl.BlockSpec((9 * C, S), lambda b: (0, 0)),
                   pl.BlockSpec((1, S), lambda b: (0, 0)),
                   pl.BlockSpec((S, NC), lambda b: (0, 0)),
                   pl.BlockSpec((1, NC), lambda b: (0, 0))]
        vmem_limit = 48 * 1024 * 1024    # headroom under v7x's 64 MiB physical

        if targets is None:
            probs, preds = pl.pallas_call(
                _fused_infer_kernel,
                out_shape=(jax.ShapeDtypeStruct((B, 1, NC), jnp.float32),
                           jax.ShapeDtypeStruct((B, 1, 1), jnp.int32)),
                grid=(num_tiles,),
                in_specs=[x_spec] + w_specs,
                out_specs=(pl.BlockSpec((Bt, 1, NC), lambda b: (b, 0, 0)),
                           pl.BlockSpec((Bt, 1, 1), lambda b: (b, 0, 0))),
                compiler_params=pltpu.CompilerParams(
                    dimension_semantics=("parallel",),
                    vmem_limit_bytes=vmem_limit),
            )(images, wfold, pbias, self.clf_w, self.clf_b)
            probs = probs.reshape(B, NC)
            preds = preds.reshape(B)
            if stacked:
                # stacked return avoids per-example slicing / host syncs
                return {'prob': probs, 'label': preds}
            return [{'prob': probs[i], 'label': preds[i]} for i in range(B)]

        # ---- training path: fused head + label-smoothing CE + accuracy ----
        if isinstance(targets, (list, tuple)):
            labels = jnp.stack([jnp.asarray(t['label'], jnp.int32)
                                for t in targets])
        elif isinstance(targets, dict):
            labels = jnp.asarray(targets['label'], jnp.int32)
        else:                                    # pre-stacked int array accepted
            labels = jnp.asarray(targets, jnp.int32)
        labels = labels.reshape(B, 1, 1)

        kern = functools.partial(_fused_train_kernel, self.smoothing, 1.0 / B)
        loss, acc = pl.pallas_call(
            kern,
            out_shape=(jax.ShapeDtypeStruct((1, 1), jnp.float32),
                       jax.ShapeDtypeStruct((1, 1), jnp.float32)),
            grid=(num_tiles,),
            in_specs=[x_spec, pl.BlockSpec((Bt, 1, 1), lambda b: (b, 0, 0))]
                     + w_specs,
            out_specs=(pl.BlockSpec((1, 1), lambda b: (0, 0)),
                       pl.BlockSpec((1, 1), lambda b: (0, 0))),
            compiler_params=pltpu.CompilerParams(
                dimension_semantics=("arbitrary",),   # loss/acc accumulate
                vmem_limit_bytes=vmem_limit),
        )(images, labels, wfold, pbias, self.clf_w, self.clf_b)
        return {'loss': loss[0, 0], 'acc': acc[0, 0]}


if __name__ == "__main__":
    key = jax.random.PRNGKey(0)
    k_img, k_param = jax.random.split(key)

    B, C, H, W = 2, 3, 16, 16
    images = jax.random.uniform(k_img, (B, C, H, W), dtype=jnp.float32)  # [0, 1)

    model = CLFModelPallas(
        num_channel=C, num_class=12,
        image_mean=(0.485, 0.456, 0.406),
        image_std=(0.229, 0.224, 0.225),
        smoothing=0.1, key=k_param)

    # inference path (targets=None): list of {'prob', 'label'} like the module
    infer = model.forward(images)
    jax.block_until_ready([o['prob'] for o in infer])

    # stacked inference (single device arrays, no per-example slicing)
    infer_stacked = model.forward(images, stacked=True)
    jax.block_until_ready(infer_stacked['prob'])

    # training path: label-smoothing CE loss + accuracy
    targets = [{'label': jnp.int32(3)}, {'label': jnp.int32(7)}]
    train_out = model.forward(images, targets)
    jax.block_until_ready(train_out['loss'])
    jax.block_until_ready(train_out['acc'])

    # ---- pure-JAX reference of the same (stripped) forward, for validation ----
    mean = model.image_mean[None, :, None, None]
    std = model.image_std[None, :, None, None]
    xn = (images - mean) / std
    stem_ref = lax.conv_general_dilated(
        xn, model.conv_w, window_strides=(2, 2), padding=((1, 1), (1, 1)),
        dimension_numbers=('NCHW', 'OIHW', 'NCHW'))
    pooled_ref = jnp.mean(stem_ref, axis=(2, 3))
    logits_ref = pooled_ref @ model.clf_w + model.clf_b
    probs_ref = jax.nn.softmax(logits_ref, axis=-1)
    label_ref = jnp.argmax(logits_ref, axis=-1)
    logp_ref = jax.nn.log_softmax(logits_ref, axis=-1)
    lbl = jnp.array([3, 7], jnp.int32)
    nll_ref = -jnp.take_along_axis(logp_ref, lbl[:, None], axis=-1)[:, 0]
    smooth_ref = -jnp.mean(logp_ref, axis=-1)
    loss_ref = jnp.mean((1.0 - model.smoothing) * nll_ref
                        + model.smoothing * smooth_ref)
    acc_ref = jnp.mean((label_ref == lbl).astype(jnp.float32))

    kprobs = jnp.stack([o['prob'] for o in infer])
    klabel = jnp.stack([o['label'] for o in infer])
    assert bool(jnp.allclose(kprobs, probs_ref, atol=1e-3, rtol=1e-3)), "probs mismatch"
    assert bool(jnp.all(klabel == label_ref)), "label mismatch"
    assert bool(jnp.allclose(infer_stacked['prob'], probs_ref,
                             atol=1e-3, rtol=1e-3)), "stacked probs mismatch"
    assert bool(jnp.all(infer_stacked['label'] == label_ref)), "stacked label mismatch"
    assert bool(jnp.allclose(train_out['loss'], loss_ref,
                             atol=1e-3, rtol=1e-3)), "loss mismatch"
    assert bool(jnp.allclose(train_out['acc'], acc_ref, atol=1e-6)), "acc mismatch"

    print("KERNEL_OK")
</pallas_src>

<mosaic_0001>
module attributes {stable_mosaic.version = 11 : i64} {
  func.func @_fused_infer_kernel(%arg0: i32, %arg1: memref<1x3x16x16xf32, #tpu.memory_space<vmem>>, %arg2: memref<27x24xf32, #tpu.memory_space<vmem>>, %arg3: memref<1x24xf32, #tpu.memory_space<vmem>>, %arg4: memref<24x12xf32, #tpu.memory_space<vmem>>, %arg5: memref<1x12xf32, #tpu.memory_space<vmem>>, %arg6: memref<1x1x12xf32, #tpu.memory_space<vmem>>, %arg7: memref<1x1x1xi32, #tpu.memory_space<vmem>>) attributes {dimension_semantics = [#tpu.dimension_semantics<parallel>], iteration_bounds = array<i64: 2>, scalar_prefetch = 0 : i64, scratch_operands = 0 : i64, tpu.core_type = #tpu.core_type<tc>, window_params = [{transform_indices = @transform_0, window_bounds = array<i64: 1, 3, 16, 16>}, {pipeline_mode = #tpu.pipeline_mode<synchronous>, transform_indices = @transform_1, window_bounds = array<i64: 27, 24>}, {pipeline_mode = #tpu.pipeline_mode<synchronous>, transform_indices = @transform_2, window_bounds = array<i64: 1, 24>}, {pipeline_mode = #tpu.pipeline_mode<synchronous>, transform_indices = @transform_3, window_bounds = array<i64: 24, 12>}, {pipeline_mode = #tpu.pipeline_mode<synchronous>, transform_indices = @transform_4, window_bounds = array<i64: 1, 12>}, {transform_indices = @transform_5, window_bounds = array<i64: 1, 1, 12>}, {transform_indices = @transform_6, window_bounds = array<i64: 1, 1, 1>}]} {
    %c0 = arith.constant 0 : index
    %c0_0 = arith.constant 0 : index
    %c0_1 = arith.constant 0 : index
    %c0_2 = arith.constant 0 : index
    %0 = vector.load %arg1[%c0, %c0_0, %c0_1, %c0_2] : memref<1x3x16x16xf32, #tpu.memory_space<vmem>>, vector<1x3x16x16xf32>
    %c0_3 = arith.constant 0 : index
    %c0_4 = arith.constant 0 : index
    %1 = vector.load %arg2[%c0_3, %c0_4] : memref<27x24xf32, #tpu.memory_space<vmem>>, vector<27x24xf32>
    %c0_5 = arith.constant 0 : index
    %c0_6 = arith.constant 0 : index
    %2 = vector.load %arg3[%c0_5, %c0_6] : memref<1x24xf32, #tpu.memory_space<vmem>>, vector<1x24xf32>
    %c0_7 = arith.constant 0 : index
    %c0_8 = arith.constant 0 : index
    %3 = vector.load %arg4[%c0_7, %c0_8] : memref<24x12xf32, #tpu.memory_space<vmem>>, vector<24x12xf32>
    %c0_9 = arith.constant 0 : index
    %c0_10 = arith.constant 0 : index
    %4 = vector.load %arg5[%c0_9, %c0_10] : memref<1x12xf32, #tpu.memory_space<vmem>>, vector<1x12xf32>
    %5 = tpu.iota {dimensions = array<i32: 3>} : vector<1x1x1x16xi32>
    %c2_i32 = arith.constant 2 : i32
    %c0_i32 = arith.constant 0 : i32
    %6 = arith.cmpi eq, %c2_i32, %c0_i32 : i32
    %c1_i32 = arith.constant 1 : i32
    %7 = arith.select %6, %c1_i32, %c2_i32 : i32
    %8 = vector.broadcast %7 : i32 to vector<1x1x1x16xi32>
    %9 = arith.remsi %5, %8 : vector<1x1x1x16xi32>
    %c0_i32_11 = arith.constant 0 : i32
    %10 = vector.broadcast %c0_i32_11 : i32 to vector<1x1x1x16xi32>
    %11 = arith.cmpi ne, %9, %10 : vector<1x1x1x16xi32>
    %c0_i32_12 = arith.constant 0 : i32
    %12 = vector.broadcast %c0_i32_12 : i32 to vector<1x1x1x16xi32>
    %13 = arith.cmpi slt, %9, %12 : vector<1x1x1x16xi32>
    %c0_i32_13 = arith.constant 0 : i32
    %14 = arith.cmpi slt, %7, %c0_i32_13 : i32
    %15 = vector.broadcast %14 : i1 to vector<1x1x1x16xi1>
    %16 = vector.broadcast %15 : vector<1x1x1x16xi1> to vector<1x1x1x16xi1>
    %17 = arith.xori %13, %16 : vector<1x1x1x16xi1>
    %18 = arith.andi %17, %11 : vector<1x1x1x16xi1>
    %19 = vector.broadcast %7 : i32 to vector<1x1x1x16xi32>
    %20 = arith.addi %9, %19 : vector<1x1x1x16xi32>
    %21 = arith.select %18, %20, %9 : vector<1x1x1x16xi1>, vector<1x1x1x16xi32>
    %c0_i32_14 = arith.constant 0 : i32
    %22 = vector.broadcast %c0_i32_14 : i32 to vector<1x1x1x16xi32>
    %23 = arith.cmpi eq, %21, %22 : vector<1x1x1x16xi32>
    %24 = arith.extui %23 : vector<1x1x1x16xi1> to vector<1x1x1x16xi32>
    %25 = arith.sitofp %24 : vector<1x1x1x16xi32> to vector<1x1x1x16xf32>
    %cst = arith.constant dense<0.000000e+00> : vector<1x3x16xf32>
    %26 = vector.multi_reduction <add>, %0, %cst [3] : vector<1x3x16x16xf32> to vector<1x3x16xf32>
    %27 = vector.broadcast %25 : vector<1x1x1x16xf32> to vector<1x3x16x16xf32>
    %28 = arith.mulf %0, %27 : vector<1x3x16x16xf32>
    %cst_15 = arith.constant dense<0.000000e+00> : vector<1x3x16xf32>
    %29 = vector.multi_reduction <add>, %28, %cst_15 [3] : vector<1x3x16x16xf32> to vector<1x3x16xf32>
    %30 = arith.subf %26, %29 : vector<1x3x16xf32>
    %31 = vector.extract_strided_slice %0 {offsets = [0, 0, 0, 15], sizes = [1, 3, 16, 1], strides = [1, 1, 1, 1]} : vector<1x3x16x16xf32> to vector<1x3x16x1xf32>
    %32 = vector.shape_cast %31 : vector<1x3x16x1xf32> to vector<1x3x16xf32>
    %33 = arith.subf %30, %32 : vector<1x3x16xf32>
    %34 = tpu.iota {dimensions = array<i32: 2>} : vector<1x1x16xi32>
    %c2_i32_16 = arith.constant 2 : i32
    %c0_i32_17 = arith.constant 0 : i32
    %35 = arith.cmpi eq, %c2_i32_16, %c0_i32_17 : i32
    %c1_i32_18 = arith.constant 1 : i32
    %36 = arith.select %35, %c1_i32_18, %c2_i32_16 : i32
    %37 = vector.broadcast %36 : i32 to vector<1x1x16xi32>
    %38 = arith.remsi %34, %37 : vector<1x1x16xi32>
    %c0_i32_19 = arith.constant 0 : i32
    %39 = vector.broadcast %c0_i32_19 : i32 to vector<1x1x16xi32>
    %40 = arith.cmpi ne, %38, %39 : vector<1x1x16xi32>
    %c0_i32_20 = arith.constant 0 : i32
    %41 = vector.broadcast %c0_i32_20 : i32 to vector<1x1x16xi32>
    %42 = arith.cmpi slt, %38, %41 : vector<1x1x16xi32>
    %c0_i32_21 = arith.constant 0 : i32
    %43 = arith.cmpi slt, %36, %c0_i32_21 : i32
    %44 = vector.broadcast %43 : i1 to vector<1x1x16xi1>
    %45 = vector.broadcast %44 : vector<1x1x16xi1> to vector<1x1x16xi1>
    %46 = arith.xori %42, %45 : vector<1x1x16xi1>
    %47 = arith.andi %46, %40 : vector<1x1x16xi1>
    %48 = vector.broadcast %36 : i32 to vector<1x1x16xi32>
    %49 = arith.addi %38, %48 : vector<1x1x16xi32>
    %50 = arith.select %47, %49, %38 : vector<1x1x16xi1>, vector<1x1x16xi32>
    %c0_i32_22 = arith.constant 0 : i32
    %51 = vector.broadcast %c0_i32_22 : i32 to vector<1x1x16xi32>
    %52 = arith.cmpi eq, %50, %51 : vector<1x1x16xi32>
    %53 = arith.extui %52 : vector<1x1x16xi1> to vector<1x1x16xi32>
    %54 = arith.sitofp %53 : vector<1x1x16xi32> to vector<1x1x16xf32>
    %cst_23 = arith.constant dense<0.000000e+00> : vector<1x3xf32>
    %55 = vector.multi_reduction <add>, %33, %cst_23 [2] : vector<1x3x16xf32> to vector<1x3xf32>
    %56 = vector.broadcast %54 : vector<1x1x16xf32> to vector<1x3x16xf32>
    %57 = arith.mulf %33, %56 : vector<1x3x16xf32>
    %cst_24 = arith.constant dense<0.000000e+00> : vector<1x3xf32>
    %58 = vector.multi_reduction <add>, %57, %cst_24 [2] : vector<1x3x16xf32> to vector<1x3xf32>
    %59 = arith.subf %55, %58 : vector<1x3xf32>
    %60 = vector.extract_strided_slice %33 {offsets = [0, 0, 15], sizes = [1, 3, 1], strides = [1, 1, 1]} : vector<1x3x16xf32> to vector<1x3x1xf32>
    %61 = vector.shape_cast %60 : vector<1x3x1xf32> to vector<1x3xf32>
    %62 = arith.subf %59, %61 : vector<1x3xf32>
    %cst_25 = arith.constant dense<0.000000e+00> : vector<1x3xf32>
    %63 = vector.multi_reduction <add>, %29, %cst_25 [2] : vector<1x3x16xf32> to vector<1x3xf32>
    %64 = vector.broadcast %54 : vector<1x1x16xf32> to vector<1x3x16xf32>
    %65 = arith.mulf %29, %64 : vector<1x3x16xf32>
    %cst_26 = arith.constant dense<0.000000e+00> : vector<1x3xf32>
    %66 = vector.multi_reduction <add>, %65, %cst_26 [2] : vector<1x3x16xf32> to vector<1x3xf32>
    %67 = arith.subf %63, %66 : vector<1x3xf32>
    %68 = vector.extract_strided_slice %29 {offsets = [0, 0, 15], sizes = [1, 3, 1], strides = [1, 1, 1]} : vector<1x3x16xf32> to vector<1x3x1xf32>
    %69 = vector.shape_cast %68 : vector<1x3x1xf32> to vector<1x3xf32>
    %70 = arith.subf %67, %69 : vector<1x3xf32>
    %cst_27 = arith.constant dense<0.000000e+00> : vector<1x3xf32>
    %71 = vector.multi_reduction <add>, %30, %cst_27 [2] : vector<1x3x16xf32> to vector<1x3xf32>
    %72 = vector.broadcast %54 : vector<1x1x16xf32> to vector<1x3x16xf32>
    %73 = arith.mulf %30, %72 : vector<1x3x16xf32>
    %cst_28 = arith.constant dense<0.000000e+00> : vector<1x3xf32>
    %74 = vector.multi_reduction <add>, %73, %cst_28 [2] : vector<1x3x16xf32> to vector<1x3xf32>
    %75 = arith.subf %71, %74 : vector<1x3xf32>
    %76 = vector.extract_strided_slice %30 {offsets = [0, 0, 15], sizes = [1, 3, 1], strides = [1, 1, 1]} : vector<1x3x16xf32> to vector<1x3x1xf32>
    %77 = vector.shape_cast %76 : vector<1x3x1xf32> to vector<1x3xf32>
    %78 = arith.subf %75, %77 : vector<1x3xf32>
    %79 = tpu.concatenate %62, %70, %78, %58, %66, %74, %59, %67, %75 in 1 : vector<1x3xf32>, vector<1x3xf32>, vector<1x3xf32>, vector<1x3xf32>, vector<1x3xf32>, vector<1x3xf32>, vector<1x3xf32>, vector<1x3xf32>, vector<1x3xf32> -> vector<1x27xf32>
    %cst_29 = arith.constant dense<0.000000e+00> : vector<1x24xf32>
    %80 = tpu.matmul %79, %1, %cst_29 {dimension_numbers = #tpu.dot_dimension_numbers<[1], [0], [0], [1], [0, 0, 1, 1], [], []>} : vector<1x27xf32>, vector<27x24xf32>, vector<1x24xf32> -> vector<1x24xf32>
    %81 = arith.addf %80, %2 : vector<1x24xf32>
    %cst_30 = arith.constant dense<0.000000e+00> : vector<1x12xf32>
    %82 = tpu.matmul %81, %3, %cst_30 {dimension_numbers = #tpu.dot_dimension_numbers<[1], [0], [0], [1], [0, 0, 1, 1], [], []>} : vector<1x24xf32>, vector<24x12xf32>, vector<1x12xf32> -> vector<1x12xf32>
    %83 = arith.addf %82, %4 : vector<1x12xf32>
    %cst_31 = arith.constant dense<0xFF800000> : vector<1xf32>
    %84 = vector.multi_reduction <maximumf>, %83, %cst_31 [1] : vector<1x12xf32> to vector<1xf32>
    %85 = vector.shape_cast %84 : vector<1xf32> to vector<1x1xf32>
    %86 = vector.broadcast %85 : vector<1x1xf32> to vector<1x12xf32>
    %87 = arith.subf %83, %86 : vector<1x12xf32>
    %88 = math.exp %87 : vector<1x12xf32>
    %cst_32 = arith.constant dense<0.000000e+00> : vector<1xf32>
    %89 = vector.multi_reduction <add>, %88, %cst_32 [1] : vector<1x12xf32> to vector<1xf32>
    %90 = vector.shape_cast %89 : vector<1xf32> to vector<1x1xf32>
    %91 = vector.broadcast %90 : vector<1x1xf32> to vector<1x12xf32>
    %92 = arith.divf %88, %91 : vector<1x12xf32>
    %c0_33 = arith.constant 0 : index
    %c0_34 = arith.constant 0 : index
    %c0_35 = arith.constant 0 : index
    %93 = vector.load %arg6[%c0_33, %c0_34, %c0_35] : memref<1x1x12xf32, #tpu.memory_space<vmem>>, vector<1x1x12xf32>
    %94 = vector.shape_cast %93 : vector<1x1x12xf32> to vector<1x12xf32>
    %95 = vector.shape_cast %92 : vector<1x12xf32> to vector<1x1x12xf32>
    tpu.vector_store %arg6[%c0_33, %c0_34, %c0_35], %95 {strides = array<i32>} : memref<1x1x12xf32, #tpu.memory_space<vmem>>, vector<1x1x12xf32>,
    %96 = tpu.iota {dimensions = array<i32: 1>} : vector<1x12xi32>
    %97 = vector.broadcast %85 : vector<1x1xf32> to vector<1x12xf32>
    %98 = arith.cmpf oeq, %83, %97 : vector<1x12xf32>
    %c12_i32 = arith.constant 12 : i32
    %99 = vector.broadcast %c12_i32 : i32 to vector<1x12xi32>
    %100 = arith.select %98, %96, %99 : vector<1x12xi1>, vector<1x12xi32>
    %cst_36 = arith.constant dense<2147483647> : vector<1xi32>
    %101 = vector.multi_reduction <minsi>, %100, %cst_36 [1] : vector<1x12xi32> to vector<1xi32>
    %102 = vector.shape_cast %101 : vector<1xi32> to vector<1x1xi32>
    %c0_37 = arith.constant 0 : index
    %c0_38 = arith.constant 0 : index
    %c0_39 = arith.constant 0 : index
    %103 = vector.load %arg7[%c0_37, %c0_38, %c0_39] : memref<1x1x1xi32, #tpu.memory_space<vmem>>, vector<1x1x1xi32>
    %104 = vector.shape_cast %103 : vector<1x1x1xi32> to vector<1x1xi32>
    %105 = vector.shape_cast %102 : vector<1x1xi32> to vector<1x1x1xi32>
    tpu.vector_store %arg7[%c0_37, %c0_38, %c0_39], %105 {strides = array<i32>} : memref<1x1x1xi32, #tpu.memory_space<vmem>>, vector<1x1x1xi32>,
    return
  }
  func.func @transform_0(%arg0: i32) -> (i32, i32, i32, i32) {
    %c0_i32 = arith.constant 0 : i32
    %c0_i32_0 = arith.constant 0 : i32
    %c0_i32_1 = arith.constant 0 : i32
    %c0_i32_2 = arith.constant 0 : i32
    return %arg0, %c0_i32, %c0_i32_0, %c0_i32_1 : i32, i32, i32, i32
  }
  func.func @transform_1(%arg0: i32) -> (i32, i32) {
    %c0_i32 = arith.constant 0 : i32
    %c0_i32_0 = arith.constant 0 : i32
    %c0_i32_1 = arith.constant 0 : i32
    return %c0_i32, %c0_i32_0 : i32, i32
  }
  func.func @transform_2(%arg0: i32) -> (i32, i32) {
    %c0_i32 = arith.constant 0 : i32
    %c0_i32_0 = arith.constant 0 : i32
    %c0_i32_1 = arith.constant 0 : i32
    return %c0_i32, %c0_i32_0 : i32, i32
  }
  func.func @transform_3(%arg0: i32) -> (i32, i32) {
    %c0_i32 = arith.constant 0 : i32
    %c0_i32_0 = arith.constant 0 : i32
    %c0_i32_1 = arith.constant 0 : i32
    return %c0_i32, %c0_i32_0 : i32, i32
  }
  func.func @transform_4(%arg0: i32) -> (i32, i32) {
    %c0_i32 = arith.constant 0 : i32
    %c0_i32_0 = arith.constant 0 : i32
    %c0_i32_1 = arith.constant 0 : i32
    return %c0_i32, %c0_i32_0 : i32, i32
  }
  func.func @transform_5(%arg0: i32) -> (i32, i32, i32) {
    %c0_i32 = arith.constant 0 : i32
    %c0_i32_0 = arith.constant 0 : i32
    %c0_i32_1 = arith.constant 0 : i32
    return %arg0, %c0_i32, %c0_i32_0 : i32, i32, i32
  }
  func.func @transform_6(%arg0: i32) -> (i32, i32, i32) {
    %c0_i32 = arith.constant 0 : i32
    %c0_i32_0 = arith.constant 0 : i32
    %c0_i32_1 = arith.constant 0 : i32
    return %arg0, %c0_i32, %c0_i32_0 : i32, i32, i32
  }
}

</mosaic_0001>

<llo_original>
// kernel: tpu_custom_call.1
$region0: #{tpu_custom_call.1}
  #allocation0 [shape = 'u32[]', space=smem, size = 0x4, offset = 0x4, fixed_abs, tag = 'smem constant byte address 0x4 - core index']
  #allocation1 [shape = 'u32[144,128]{1,0:T(1,128)}', space=vmem, size = 0x12000, scoped, tag = 'internal scratch']
  %s0 = inlined_call_operand.vmem [shape: f32[2,3,16,16], index: 0, kind: input, shape index: {}]
  %s1 = inlined_call_operand.vmem [shape: f32[27,24], index: 1, kind: input, shape index: {}]
  %s2 = inlined_call_operand.vmem [shape: f32[1,24], index: 2, kind: input, shape index: {}]
  %s3 = inlined_call_operand.vmem [shape: f32[24,12], index: 3, kind: input, shape index: {}]
  %s4 = inlined_call_operand.vmem [shape: f32[1,12], index: 4, kind: input, shape index: {}]
  %s5 = inlined_call_operand.hbm [shape: f32[2,1,12], index: 5, kind: output, shape index: {0}]
  %s6 = inlined_call_operand.vmem [shape: s32[2,1,1], index: 6, kind: output, shape index: {1}]
  %7 = xla_tuple %s5, %s6
  %s8 = sld [smem:[#allocation0]]
  $region61: #{tpu_custom_call.1} parent=0
    _
  %s10 = ssub.s32 1, %s8
  %s11 = scalar_select 0, %s10, %s8
  $region1: #{tpu_custom_call.1} parent=0
    #allocation2 [shape = 'u8[1024]{0}', space=vmem, size = 0x400, scoped, tag = 'output window, operand 0']
    #allocation3 [shape = 's32[2]{0}', space=sflag, size = 0x8, scoped, tag = 'scoped memory for tpu_custom_call.1']
    %12 = vsyncpa [#allocation3], 0
    %s13 = scalar_lea.sflag [#allocation3], 1
    %14 = vsyncpa %s13, 0
    loop: start=0, step=1, limit=4
    $region2: #{tpu_custom_call.1} parent=1 // loop_pre_header
      _
    $region3: #{tpu_custom_call.1} parent=1 // loop_header
      %s16 = sphi 0, %s20
      %p17 = scmp.ge.s32.totalorder %s16, 4
      %s26 = sphi 0, %s28
      %s29 = sphi 0, %s26
      %s30 = sphi 0, %s29
      %s46 = sphi 0, %s30
      %s50 = sphi 0, %s50
      %s52 = sphi 0, %s50
      %s53 = sphi 0, %s52
      %s67 = sphi 0, %s53
      %s71 = sphi 0, %s71
      %s73 = sphi 0, %s71
      %s74 = sphi 0, %s73
      %s88 = sphi 0, %s74
      %s92 = sphi 0, %s92
      %s94 = sphi 0, %s92
      %s95 = sphi 0, %s94
      %s109 = sphi 0, %s95
      %s113 = sphi 0, %s113
      %s115 = sphi 0, %s113
      %s116 = sphi 0, %s115
      %s130 = sphi 0, %s116
      %s136 = sphi 0, %s138
      %s139 = sphi 0, %s136
      %s140 = sphi 0, %s139
      %s156 = sphi 0, %s140
      %s162 = sphi 0, %s164
      %s165 = sphi 0, %s162
      %s166 = sphi 0, %s165
      %s182 = sphi 0, %s166
    $region4: #{tpu_custom_call.1} parent=1 // loop_header_branch
      %19 = sbr.rel (%p17) target = $region8
    $region5: #{tpu_custom_call.1} parent=1 // loop_body
      %s21 = ssub.s32 %s16, 1
      %s22 = ssub.s32 %s16, 2
      %s23 = sadd.s32 %s16, 1
      %s24 = ssub.s32 %s16, %s23
      %p25 = scmp.eq.s32.totalorder %s24, 0
      %s27 = sadd.s32 %s26, 1
      %s28 = scalar_select %p25, %s26, %s27
      %p31 = pneg %p25
      %p32 = scmp.eq.s32.totalorder %s16, 1
      %p33 = por %p31, %p32
      %p34 = scmp.ne.s32.totalorder %s26, %s29
      %p35 = scmp.eq.s32.totalorder %s16, 0
      %p36 = por %p34, %p35
      %p37 = scmp.ne.s32.totalorder %s26, %s29
      %p38 = scmp.eq.s32.totalorder %s21, 1
      %p39 = por %p37, %p38
      %p40 = scmp.ne.s32.totalorder %s29, %s30
      %p41 = scmp.eq.s32.totalorder %s21, 0
      %p42 = por %p40, %p41
      %p43 = scmp.ne.s32.totalorder %s29, %s30
      %p44 = scmp.eq.s32.totalorder %s22, 1
      %p45 = por %p43, %p44
      %p47 = scmp.ne.s32.totalorder %s30, %s46
      %p48 = scmp.eq.s32.totalorder %s22, 0
      %p49 = por %p47, %p48
      %s51 = sadd.s32 %s50, 1
      %p54 = scmp.eq.s32.totalorder %s16, 1
      %p55 = scmp.ne.s32.totalorder %s50, %s52
      %p56 = scmp.eq.s32.totalorder %s16, 0
      %p57 = por %p55, %p56
      %p58 = scmp.ne.s32.totalorder %s50, %s52
      %p59 = scmp.eq.s32.totalorder %s21, 1
      %p60 = por %p58, %p59
      %p61 = scmp.ne.s32.totalorder %s52, %s53
      %p62 = scmp.eq.s32.totalorder %s21, 0
      %p63 = por %p61, %p62
      %p64 = scmp.ne.s32.totalorder %s52, %s53
      %p65 = scmp.eq.s32.totalorder %s22, 1
      %p66 = por %p64, %p65
      %p68 = scmp.ne.s32.totalorder %s53, %s67
      %p69 = scmp.eq.s32.totalorder %s22, 0
      %p70 = por %p68, %p69
      %s72 = sadd.s32 %s71, 1
      %p75 = scmp.eq.s32.totalorder %s16, 1
      %p76 = scmp.ne.s32.totalorder %s71, %s73
      %p77 = scmp.eq.s32.totalorder %s16, 0
      %p78 = por %p76, %p77
      %p79 = scmp.ne.s32.totalorder %s71, %s73
      %p80 = scmp.eq.s32.totalorder %s21, 1
      %p81 = por %p79, %p80
      %p82 = scmp.ne.s32.totalorder %s73, %s74
      %p83 = scmp.eq.s32.totalorder %s21, 0
      %p84 = por %p82, %p83
      %p85 = scmp.ne.s32.totalorder %s73, %s74
      %p86 = scmp.eq.s32.totalorder %s22, 1
      %p87 = por %p85, %p86
      %p89 = scmp.ne.s32.totalorder %s74, %s88
      %p90 = scmp.eq.s32.totalorder %s22, 0
      %p91 = por %p89, %p90
      %s93 = sadd.s32 %s92, 1
      %p96 = scmp.eq.s32.totalorder %s16, 1
      %p97 = scmp.ne.s32.totalorder %s92, %s94
      %p98 = scmp.eq.s32.totalorder %s16, 0
      %p99 = por %p97, %p98
      %p100 = scmp.ne.s32.totalorder %s92, %s94
      %p101 = scmp.eq.s32.totalorder %s21, 1
      %p102 = por %p100, %p101
      %p103 = scmp.ne.s32.totalorder %s94, %s95
      %p104 = scmp.eq.s32.totalorder %s21, 0
      %p105 = por %p103, %p104
      %p106 = scmp.ne.s32.totalorder %s94, %s95
      %p107 = scmp.eq.s32.totalorder %s22, 1
      %p108 = por %p106, %p107
      %p110 = scmp.ne.s32.totalorder %s95, %s109
      %p111 = scmp.eq.s32.totalorder %s22, 0
      %p112 = por %p110, %p111
      %s114 = sadd.s32 %s113, 1
      %p117 = scmp.eq.s32.totalorder %s16, 1
      %p118 = scmp.ne.s32.totalorder %s113, %s115
      %p119 = scmp.eq.s32.totalorder %s16, 0
      %p120 = por %p118, %p119
      %p121 = scmp.ne.s32.totalorder %s113, %s115
      %p122 = scmp.eq.s32.totalorder %s21, 1
      %p123 = por %p121, %p122
      %p124 = scmp.ne.s32.totalorder %s115, %s116
      %p125 = scmp.eq.s32.totalorder %s21, 0
      %p126 = por %p124, %p125
      %p127 = scmp.ne.s32.totalorder %s115, %s116
      %p128 = scmp.eq.s32.totalorder %s22, 1
      %p129 = por %p127, %p128
      %p131 = scmp.ne.s32.totalorder %s116, %s130
      %p132 = scmp.eq.s32.totalorder %s22, 0
      %p133 = por %p131, %p132
      %s134 = ssub.s32 %s16, %s23
      %p135 = scmp.eq.s32.totalorder %s134, 0
      %s137 = sadd.s32 %s136, 1
      %s138 = scalar_select %p135, %s136, %s137
      %p141 = pneg %p135
      %p142 = scmp.eq.s32.totalorder %s16, 1
      %p143 = por %p141, %p142
      %p144 = scmp.ne.s32.totalorder %s136, %s139
      %p145 = scmp.eq.s32.totalorder %s16, 0
      %p146 = por %p144, %p145
      %p147 = scmp.ne.s32.totalorder %s136, %s139
      %p148 = scmp.eq.s32.totalorder %s21, 1
      %p149 = por %p147, %p148
      %p150 = scmp.ne.s32.totalorder %s139, %s140
      %p151 = scmp.eq.s32.totalorder %s21, 0
      %p152 = por %p150, %p151
      %p153 = scmp.ne.s32.totalorder %s139, %s140
      %p154 = scmp.eq.s32.totalorder %s22, 1
      %p155 = por %p153, %p154
      %p157 = scmp.ne.s32.totalorder %s140, %s156
      %p158 = scmp.eq.s32.totalorder %s22, 0
      %p159 = por %p157, %p158
      %s160 = ssub.s32 %s16, %s23
      %p161 = scmp.eq.s32.totalorder %s160, 0
      %s163 = sadd.s32 %s162, 1
      %s164 = scalar_select %p161, %s162, %s163
      %p167 = pneg %p161
      %p168 = scmp.eq.s32.totalorder %s16, 1
      %p169 = por %p167, %p168
      %p170 = scmp.ne.s32.totalorder %s162, %s165
      %p171 = scmp.eq.s32.totalorder %s16, 0
      %p172 = por %p170, %p171
      %p173 = scmp.ne.s32.totalorder %s162, %s165
      %p174 = scmp.eq.s32.totalorder %s21, 1
      %p175 = por %p173, %p174
      %p176 = scmp.ne.s32.totalorder %s165, %s166
      %p177 = scmp.eq.s32.totalorder %s21, 0
      %p178 = por %p176, %p177
      %p179 = scmp.ne.s32.totalorder %s165, %s166
      %p180 = scmp.eq.s32.totalorder %s22, 1
      %p181 = por %p179, %p180
      %p183 = scmp.ne.s32.totalorder %s166, %s182
      %p184 = scmp.eq.s32.totalorder %s22, 0
      %p185 = por %p183, %p184
      %p186 = scmp.le.s32.totalorder 1, %s16
      %p187 = scmp.lt.s32.totalorder %s16, 3
      %p188 = pnand %p186, %p187
      %p189 = pneg %p188
      // Predicated region
      $region9: #{tpu_custom_call.1} parent=5 // pred_check
        _
      $region10: #{tpu_custom_call.1} parent=5 // pred_check_branch
        %191 = sbr.rel (%p188) target = $region12
      $region11: #{tpu_custom_call.1} parent=5 // pred_region
        %s192 = ssub.s32 %s16, 1
        // Predicated region
        $region13: #{tpu_custom_call.1} parent=11 // pred_check
          %p193 = pneg %p63
        $region14: #{tpu_custom_call.1} parent=11 // pred_check_branch
          %195 = sbr.rel (%p193) target = $region16
        $region15: #{tpu_custom_call.1} parent=11 // pred_region
          _
        $region16: #{tpu_custom_call.1} parent=11 // pred_fallthru
          _
        // Predicated region
        $region17: #{tpu_custom_call.1} parent=11 // pred_check
          %p196 = pneg %p84
        $region18: #{tpu_custom_call.1} parent=11 // pred_check_branch
          %198 = sbr.rel (%p196) target = $region20
        $region19: #{tpu_custom_call.1} parent=11 // pred_region
          _
        $region20: #{tpu_custom_call.1} parent=11 // pred_fallthru
          _
        // Predicated region
        $region21: #{tpu_custom_call.1} parent=11 // pred_check
          %p199 = pneg %p105
        $region22: #{tpu_custom_call.1} parent=11 // pred_check_branch
          %201 = sbr.rel (%p199) target = $region24
        $region23: #{tpu_custom_call.1} parent=11 // pred_region
          _
        $region24: #{tpu_custom_call.1} parent=11 // pred_fallthru
          _
        // Predicated region
        $region25: #{tpu_custom_call.1} parent=11 // pred_check
          %p202 = pneg %p126
        $region26: #{tpu_custom_call.1} parent=11 // pred_check_branch
          %204 = sbr.rel (%p202) target = $region28
        $region27: #{tpu_custom_call.1} parent=11 // pred_region
          _
        $region28: #{tpu_custom_call.1} parent=11 // pred_fallthru
          _
      $region12: #{tpu_custom_call.1} parent=5 // pred_fallthru
        _
      %p205 = scmp.lt.s32.totalorder %s16, 2
      // Predicated region
      $region29: #{tpu_custom_call.1} parent=5 // pred_check
        %p206 = pneg %p205
      $region30: #{tpu_custom_call.1} parent=5 // pred_check_branch
        %208 = sbr.rel (%p206) target = $region32
      $region31: #{tpu_custom_call.1} parent=5 // pred_region
        // Predicated region
        $region33: #{tpu_custom_call.1} parent=31 // pred_check
          %p209 = pneg %p36
        $region34: #{tpu_custom_call.1} parent=31 // pred_check_branch
          %211 = sbr.rel (%p209) target = $region36
        $region35: #{tpu_custom_call.1} parent=31 // pred_region
          %p212 = scmp.lt.s32.totalorder %s16, 1
          %s213 = scalar_select %p212, %s16, 1
          %s214 = smul.addr %s213, 6
          %s215 = smul.addr %s214, 8
          %s216 = scalar_lea.vmem %s0, %s215
        $region36: #{tpu_custom_call.1} parent=31 // pred_fallthru
          _
      $region32: #{tpu_custom_call.1} parent=5 // pred_fallthru
        _
      %p217 = scmp.le.s32.totalorder 1, %s16
      %p218 = scmp.lt.s32.totalorder %s16, 3
      %p219 = pnand %p217, %p218
      %p220 = pneg %p219
      // Predicated region
      $region37: #{tpu_custom_call.1} parent=5 // pred_check
        _
      $region38: #{tpu_custom_call.1} parent=5 // pred_check_branch
        %222 = sbr.rel (%p219) target = $region40
      $region39: #{tpu_custom_call.1} parent=5 // pred_region
        %s223 = ssub.s32 %s16, 1
        %p224 = scmp.lt.s32.totalorder %s21, 1
        %s225 = scalar_select %p224, %s21, 1
        %s226 = smul.addr %s225, 6
        %s227 = smul.addr %s226, 8
        %s228 = scalar_lea.vmem %s0, %s227
        %p229 = pneg %p42
        %p230 = pneg %p39
        %p231 = pneg %p63
        %p232 = pneg %p60
        %p233 = pneg %p84
        %p234 = pneg %p81
        %p235 = pneg %p105
        %p236 = pneg %p102
        %p237 = pneg %p126
        %p238 = pneg %p123
        %p239 = pneg %p152
        %p240 = pneg %p149
        %s241 = sand.u32 %s139, 1
        %s242 = scalar_lea.sflag [#allocation3], %s241
        %s243 = sand.u32 %s139, 1
        %s244 = scalar_lea.vmem [#allocation2], %s243
        %p245 = pneg %p178
        %p246 = pneg %p175
        %p247 = scmp.lt.s32.totalorder %s21, 1
        %s248 = scalar_select %p247, %s21, 1
        %s249 = scalar_lea.vmem %s6, %s248
        %p250 = scmp.lt.s32.totalorder %s21, 1
        %s251 = scalar_select %p250, %s21, 1
        %s252 = smul.addr %s251, 6
        %s253 = smul.addr %s252, 8
        %s254 = scalar_lea.vmem %s0, %s253
        %p255 = scmp.lt.s32.totalorder %s21, 1
        %s256 = scalar_select %p255, %s21, 1
        %s257 = scalar_lea.vmem %s6, %s256
        %v258 = vld [vmem:[%s254] sm:$0xff]
        %v259 = vld [vmem:[%s254 + $0x8] sm:$0xff]
        %v260 = vld [vmem:[%s254 + $0x10] sm:$0xff]
        %v261 = vld [vmem:[%s254 + $0x18] sm:$0xff]
        %v262 = vld [vmem:[%s254 + $0x20] sm:$0xff]
        %v263 = vld [vmem:[%s254 + $0x28] sm:$0xff]
        %v264 = vld [vmem:[%s1] sm:$0xff]
        %v265 = vld [vmem:[%s1 + $0x8] sm:$0xff]
        %v266 = vld [vmem:[%s1 + $0x10] sm:$0xff]
        %v267 = vld [vmem:[%s1 + $0x18] sm:$0x7]
        %v268 = vld [vmem:[%s2] sm:$0x1]
        %v269 = vld [vmem:[%s3] sm:$0xff]
        %v270 = vld [vmem:[%s3 + $0x8] sm:$0xff]
        %v271 = vld [vmem:[%s3 + $0x10] sm:$0xff]
        %v272 = vld [vmem:[%s4] sm:$0x1]
        %v273 = vlaneseq
        %v274 = vand.u32 %v273, 127
        %vm275 = vcmp.lt.s32.totalorder %v274, 0
        %v276 = vsub.s32 0, %v274
        %v277 = vsel %vm275, %v276, %v274
        %v278 = vshrl.u32 %v277, 1
        %v279 = vand.u32 %v277, 1
        %v280 = vsub.s32 0, %v279
        %v281 = vsel %vm275, %v280, %v279
        %vm282 = vcmp.ne.s32.totalorder %v281, 0
        %vm283 = vcmp.lt.s32.totalorder %v281, 0
        %vm284 = vmand %vm283, %vm282
        %v285 = vadd.s32 %v281, 2
        %v286 = vsel %vm284, %v285, %v281
        %vm287 = vcmp.eq.s32.totalorder %v286, 0
        %v288 = vsel %vm287, 1, 0
        %v289 = vcvt.s32.f32 %v288
        %vm290 = vcmask 130048
        %v291 = vsel %vm290, %v258, 0.0
        %292 = vadd.xlane.f32.xlu0 %v291
        %v293 = vpop.xlane.xlu0 %292
        %v294 = vsel %vm290, %v259, 0.0
        %295 = vadd.xlane.f32.xlu0 %v294
        %v296 = vpop.xlane.xlu0 %295
        %v297 = vsel %vm290, %v260, 0.0
        %298 = vadd.xlane.f32.xlu0 %v297
        %v299 = vpop.xlane.xlu0 %298
        %v300 = vsel %vm290, %v261, 0.0
        %301 = vadd.xlane.f32.xlu0 %v300
        %v302 = vpop.xlane.xlu0 %301
        %v303 = vsel %vm290, %v262, 0.0
        %304 = vadd.xlane.f32.xlu0 %v303
        %v305 = vpop.xlane.xlu0 %304
        %v306 = vsel %vm290, %v263, 0.0
        %307 = vadd.xlane.f32.xlu0 %v306
        %v308 = vpop.xlane.xlu0 %307
        %v309 = vmul.f32 %v258, %v289
        %v310 = vmul.f32 %v259, %v289
        %v311 = vmul.f32 %v260, %v289
        %v312 = vmul.f32 %v261, %v289
        %v313 = vmul.f32 %v262, %v289
        %v314 = vmul.f32 %v263, %v289
        %v315 = vsel %vm290, %v309, 0.0
        %316 = vadd.xlane.f32.xlu0 %v315
        %v317 = vpop.xlane.xlu0 %316
        %v318 = vsel %vm290, %v310, 0.0
        %319 = vadd.xlane.f32.xlu0 %v318
        %v320 = vpop.xlane.xlu0 %319
        %v321 = vsel %vm290, %v311, 0.0
        %322 = vadd.xlane.f32.xlu0 %v321
        %v323 = vpop.xlane.xlu0 %322
        %v324 = vsel %vm290, %v312, 0.0
        %325 = vadd.xlane.f32.xlu0 %v324
        %v326 = vpop.xlane.xlu0 %325
        %v327 = vsel %vm290, %v313, 0.0
        %328 = vadd.xlane.f32.xlu0 %v327
        %v329 = vpop.xlane.xlu0 %328
        %v330 = vsel %vm290, %v314, 0.0
        %331 = vadd.xlane.f32.xlu0 %v330
        %v332 = vpop.xlane.xlu0 %331
        %v333 = vsub.f32 %v293, %v317
        %v334 = vsub.f32 %v296, %v320
        %v335 = vsub.f32 %v299, %v323
        %v336 = vsub.f32 %v302, %v326
        %v337 = vsub.f32 %v305, %v329
        %v338 = vsub.f32 %v308, %v332
        %v339 = vsub.f32 %v333, %v258
        %v340 = vsub.f32 %v334, %v259
        %v341 = vsub.f32 %v335, %v260
        %v342 = vsub.f32 %v336, %v261
        %v343 = vsub.f32 %v337, %v262
        %v344 = vsub.f32 %v338, %v263
        %351 = vset.pattern.permute.xlu0 15
        %352 = vperm.xlu0 %351, %v339
        %v353 = vpop.permute.xlu0 %352
        %354 = vset.pattern.permute.xlu0 15
        %355 = vperm.xlu0 %354, %v340
        %v356 = vpop.permute.xlu0 %355
        %357 = vset.pattern.permute.xlu0 15
        %358 = vperm.xlu0 %357, %v341
        %v359 = vpop.permute.xlu0 %358
        %360 = vset.pattern.permute.xlu0 15
        %361 = vperm.xlu0 %360, %v342
        %v362 = vpop.permute.xlu0 %361
        %363 = vset.pattern.permute.xlu0 15
        %364 = vperm.xlu0 %363, %v343
        %v365 = vpop.permute.xlu0 %364
        %366 = vset.pattern.permute.xlu0 15
        %367 = vperm.xlu0 %366, %v344
        %v368 = vpop.permute.xlu0 %367
        %v369 = vlaneseq
        %v370 = vshrl.u32 %v369, 7
        %v371 = vsub.s32 %v274, %v370
        %v372 = vrot.slane %v353, %v371
        %v373 = vadd.s32 %v274, 4294967288
        %v374 = vlaneseq
        %v375 = vshrl.u32 %v374, 7
        %v376 = vsub.s32 %v373, %v375
        %v377 = vrot.slane %v356, %v376
        %vm378 = vcmask 130112
        %v379 = vsel %vm378, %v377, %v372
        %v380 = vlaneseq
        %v381 = vshrl.u32 %v380, 7
        %v382 = vsub.s32 %v274, %v381
        %v383 = vrot.slane %v359, %v382
        %v384 = vlaneseq
        %v385 = vshrl.u32 %v384, 7
        %v386 = vsub.s32 %v373, %v385
        %v387 = vrot.slane %v362, %v386
        %v388 = vsel %vm378, %v387, %v383
        %v389 = vlaneseq
        %v390 = vshrl.u32 %v389, 7
        %v391 = vsub.s32 %v274, %v390
        %v392 = vrot.slane %v365, %v391
        %v393 = vlaneseq
        %v394 = vshrl.u32 %v393, 7
        %v395 = vsub.s32 %v373, %v394
        %v396 = vrot.slane %v368, %v395
        %v397 = vsel %vm378, %v396, %v392
        %vm398 = vcmask 1041409
        %v399 = vsel %vm398, %v388, %v379
        %vm400 = vcmask 1042434
        %v401 = vsel %vm400, %v397, %v399
        %vm403 = vcmask 124928
        %v404 = vsel %vm403, %v401, 0.0
        %405 = vadd.xlane.f32.xlu0 %v404
        %v406 = vpop.xlane.xlu0 %405
        %409 = vbcast.lane.b32.xlu0 %v289, 256
        %v410 = vpop.permute.xlu0 %409
        %s412 = sor.u32 256, 8
        %413 = vbcast.lane.b32.xlu0 %v289, %s412
        %v414 = vpop.permute.xlu0 %413
        %v417 = vmul.f32 %v339, %v410
        %v418 = vmul.f32 %v340, %v414
        %v419 = vmul.f32 %v341, %v410
        %v420 = vmul.f32 %v342, %v414
        %v421 = vmul.f32 %v343, %v410
        %v422 = vmul.f32 %v344, %v414
        %429 = vset.pattern.permute.xlu0 15
        %430 = vperm.xlu0 %429, %v417
        %v431 = vpop.permute.xlu0 %430
        %432 = vset.pattern.permute.xlu0 15
        %433 = vperm.xlu0 %432, %v418
        %v434 = vpop.permute.xlu0 %433
        %435 = vset.pattern.permute.xlu0 15
        %436 = vperm.xlu0 %435, %v419
        %v437 = vpop.permute.xlu0 %436
        %438 = vset.pattern.permute.xlu0 15
        %439 = vperm.xlu0 %438, %v420
        %v440 = vpop.permute.xlu0 %439
        %441 = vset.pattern.permute.xlu0 15
        %442 = vperm.xlu0 %441, %v421
        %v443 = vpop.permute.xlu0 %442
        %444 = vset.pattern.permute.xlu0 15
        %445 = vperm.xlu0 %444, %v422
        %v446 = vpop.permute.xlu0 %445
        %v447 = vlaneseq
        %v448 = vshrl.u32 %v447, 7
        %v449 = vsub.s32 %v274, %v448
        %v450 = vrot.slane %v431, %v449
        %v451 = vlaneseq
        %v452 = vshrl.u32 %v451, 7
        %v453 = vsub.s32 %v373, %v452
        %v454 = vrot.slane %v434, %v453
        %v455 = vsel %vm378, %v454, %v450
        %v456 = vlaneseq
        %v457 = vshrl.u32 %v456, 7
        %v458 = vsub.s32 %v274, %v457
        %v459 = vrot.slane %v437, %v458
        %v460 = vlaneseq
        %v461 = vshrl.u32 %v460, 7
        %v462 = vsub.s32 %v373, %v461
        %v463 = vrot.slane %v440, %v462
        %v464 = vsel %vm378, %v463, %v459
        %v465 = vlaneseq
        %v466 = vshrl.u32 %v465, 7
        %v467 = vsub.s32 %v274, %v466
        %v468 = vrot.slane %v443, %v467
        %v469 = vlaneseq
        %v470 = vshrl.u32 %v469, 7
        %v471 = vsub.s32 %v373, %v470
        %v472 = vrot.slane %v446, %v471
        %v473 = vsel %vm378, %v472, %v468
        %v474 = vsel %vm398, %v464, %v455
        %v475 = vsel %vm400, %v473, %v474
        %v477 = vsel %vm403, %v475, 0.0
        %478 = vadd.xlane.f32.xlu0 %v477
        %v479 = vpop.xlane.xlu0 %478
        %v480 = vsub.f32 %v406, %v479
        %v481 = vrot.slane %v340, 7
        %v482 = vrot.slane %v342, 6
        %v483 = vsel %vm398, %v482, %v481
        %v484 = vrot.slane %v344, 5
        %v485 = vsel %vm400, %v484, %v483
        %486 = vrot.lane.b32.xlu0 %v485, 113
        %v487 = vpop.permute.xlu0 %486
        %v489 = vsub.f32 %v480, %v487
        %v496 = vlaneseq
        %v497 = vshrl.u32 %v496, 7
        %v498 = vsub.s32 %v274, %v497
        %v499 = vrot.slane %v317, %v498
        %v500 = vlaneseq
        %v501 = vshrl.u32 %v500, 7
        %v502 = vsub.s32 %v373, %v501
        %v503 = vrot.slane %v320, %v502
        %v504 = vsel %vm378, %v503, %v499
        %v505 = vlaneseq
        %v506 = vshrl.u32 %v505, 7
        %v507 = vsub.s32 %v274, %v506
        %v508 = vrot.slane %v323, %v507
        %v509 = vlaneseq
        %v510 = vshrl.u32 %v509, 7
        %v511 = vsub.s32 %v373, %v510
        %v512 = vrot.slane %v326, %v511
        %v513 = vsel %vm378, %v512, %v508
        %v514 = vlaneseq
        %v515 = vshrl.u32 %v514, 7
        %v516 = vsub.s32 %v274, %v515
        %v517 = vrot.slane %v329, %v516
        %v518 = vlaneseq
        %v519 = vshrl.u32 %v518, 7
        %v520 = vsub.s32 %v373, %v519
        %v521 = vrot.slane %v332, %v520
        %v522 = vsel %vm378, %v521, %v517
        %v523 = vsel %vm398, %v513, %v504
        %v524 = vsel %vm400, %v522, %v523
        %v526 = vsel %vm403, %v524, 0.0
        %527 = vadd.xlane.f32.xlu0 %v526
        %v528 = vpop.xlane.xlu0 %527
        %v529 = vmul.f32 %v317, %v410
        %v530 = vmul.f32 %v320, %v414
        %v531 = vmul.f32 %v323, %v410
        %v532 = vmul.f32 %v326, %v414
        %v533 = vmul.f32 %v329, %v410
        %v534 = vmul.f32 %v332, %v414
        %541 = vset.pattern.permute.xlu0 0
        %542 = vperm.xlu0 %541, %v529
        %v543 = vpop.permute.xlu0 %542
        %544 = vset.pattern.permute.xlu0 0
        %545 = vperm.xlu0 %544, %v530
        %v546 = vpop.permute.xlu0 %545
        %547 = vset.pattern.permute.xlu0 0
        %548 = vperm.xlu0 %547, %v531
        %v549 = vpop.permute.xlu0 %548
        %550 = vset.pattern.permute.xlu0 0
        %551 = vperm.xlu0 %550, %v532
        %v552 = vpop.permute.xlu0 %551
        %553 = vset.pattern.permute.xlu0 0
        %554 = vperm.xlu0 %553, %v533
        %v555 = vpop.permute.xlu0 %554
        %556 = vset.pattern.permute.xlu0 0
        %557 = vperm.xlu0 %556, %v534
        %v558 = vpop.permute.xlu0 %557
        %v559 = vlaneseq
        %v560 = vshrl.u32 %v559, 7
        %v561 = vsub.s32 %v274, %v560
        %v562 = vrot.slane %v543, %v561
        %v563 = vlaneseq
        %v564 = vshrl.u32 %v563, 7
        %v565 = vsub.s32 %v373, %v564
        %v566 = vrot.slane %v546, %v565
        %v567 = vsel %vm378, %v566, %v562
        %v568 = vlaneseq
        %v569 = vshrl.u32 %v568, 7
        %v570 = vsub.s32 %v274, %v569
        %v571 = vrot.slane %v549, %v570
        %v572 = vlaneseq
        %v573 = vshrl.u32 %v572, 7
        %v574 = vsub.s32 %v373, %v573
        %v575 = vrot.slane %v552, %v574
        %v576 = vsel %vm378, %v575, %v571
        %v577 = vlaneseq
        %v578 = vshrl.u32 %v577, 7
        %v579 = vsub.s32 %v274, %v578
        %v580 = vrot.slane %v555, %v579
        %v581 = vlaneseq
        %v582 = vshrl.u32 %v581, 7
        %v583 = vsub.s32 %v373, %v582
        %v584 = vrot.slane %v558, %v583
        %v585 = vsel %vm378, %v584, %v580
        %v586 = vsel %vm398, %v576, %v567
        %v587 = vsel %vm400, %v585, %v586
        %v589 = vsel %vm403, %v587, 0.0
        %590 = vadd.xlane.f32.xlu0 %v589
        %v591 = vpop.xlane.xlu0 %590
        %v592 = vsub.f32 %v528, %v591
        %v593 = vrot.slane %v320, 7
        %v594 = vrot.slane %v326, 6
        %v595 = vsel %vm398, %v594, %v593
        %v596 = vrot.slane %v332, 5
        %v597 = vsel %vm400, %v596, %v595
        %v599 = vsub.f32 %v592, %v597
        %v606 = vlaneseq
        %v607 = vshrl.u32 %v606, 7
        %v608 = vsub.s32 %v274, %v607
        %v609 = vrot.slane %v333, %v608
        %v610 = vlaneseq
        %v611 = vshrl.u32 %v610, 7
        %v612 = vsub.s32 %v373, %v611
        %v613 = vrot.slane %v334, %v612
        %v614 = vsel %vm378, %v613, %v609
        %v615 = vlaneseq
        %v616 = vshrl.u32 %v615, 7
        %v617 = vsub.s32 %v274, %v616
        %v618 = vrot.slane %v335, %v617
        %v619 = vlaneseq
        %v620 = vshrl.u32 %v619, 7
        %v621 = vsub.s32 %v373, %v620
        %v622 = vrot.slane %v336, %v621
        %v623 = vsel %vm378, %v622, %v618
        %v624 = vlaneseq
        %v625 = vshrl.u32 %v624, 7
        %v626 = vsub.s32 %v274, %v625
        %v627 = vrot.slane %v337, %v626
        %v628 = vlaneseq
        %v629 = vshrl.u32 %v628, 7
        %v630 = vsub.s32 %v373, %v629
        %v631 = vrot.slane %v338, %v630
        %v632 = vsel %vm378, %v631, %v627
        %v633 = vsel %vm398, %v623, %v614
        %v634 = vsel %vm400, %v632, %v633
        %v636 = vsel %vm403, %v634, 0.0
        %637 = vadd.xlane.f32.xlu0 %v636
        %v638 = vpop.xlane.xlu0 %637
        %v639 = vmul.f32 %v333, %v410
        %v640 = vmul.f32 %v334, %v414
        %v641 = vmul.f32 %v335, %v410
        %v642 = vmul.f32 %v336, %v414
        %v643 = vmul.f32 %v337, %v410
        %v644 = vmul.f32 %v338, %v414
        %651 = vset.pattern.permute.xlu0 0
        %652 = vperm.xlu0 %651, %v639
        %v653 = vpop.permute.xlu0 %652
        %654 = vset.pattern.permute.xlu0 0
        %655 = vperm.xlu0 %654, %v640
        %v656 = vpop.permute.xlu0 %655
        %657 = vset.pattern.permute.xlu0 0
        %658 = vperm.xlu0 %657, %v641
        %v659 = vpop.permute.xlu0 %658
        %660 = vset.pattern.permute.xlu0 0
        %661 = vperm.xlu0 %660, %v642
        %v662 = vpop.permute.xlu0 %661
        %663 = vset.pattern.permute.xlu0 0
        %664 = vperm.xlu0 %663, %v643
        %v665 = vpop.permute.xlu0 %664
        %666 = vset.pattern.permute.xlu0 0
        %667 = vperm.xlu0 %666, %v644
        %v668 = vpop.permute.xlu0 %667
        %v669 = vlaneseq
        %v670 = vshrl.u32 %v669, 7
        %v671 = vsub.s32 %v274, %v670
        %v672 = vrot.slane %v653, %v671
        %v673 = vlaneseq
        %v674 = vshrl.u32 %v673, 7
        %v675 = vsub.s32 %v373, %v674
        %v676 = vrot.slane %v656, %v675
        %v677 = vsel %vm378, %v676, %v672
        %v678 = vlaneseq
        %v679 = vshrl.u32 %v678, 7
        %v680 = vsub.s32 %v274, %v679
        %v681 = vrot.slane %v659, %v680
        %v682 = vlaneseq
        %v683 = vshrl.u32 %v682, 7
        %v684 = vsub.s32 %v373, %v683
        %v685 = vrot.slane %v662, %v684
        %v686 = vsel %vm378, %v685, %v681
        %v687 = vlaneseq
        %v688 = vshrl.u32 %v687, 7
        %v689 = vsub.s32 %v274, %v688
        %v690 = vrot.slane %v665, %v689
        %v691 = vlaneseq
        %v692 = vshrl.u32 %v691, 7
        %v693 = vsub.s32 %v373, %v692
        %v694 = vrot.slane %v668, %v693
        %v695 = vsel %vm378, %v694, %v690
        %v696 = vsel %vm398, %v686, %v677
        %v697 = vsel %vm400, %v695, %v696
        %v699 = vsel %vm403, %v697, 0.0
        %700 = vadd.xlane.f32.xlu0 %v699
        %v701 = vpop.xlane.xlu0 %700
        %v702 = vsub.f32 %v638, %v701
        %v703 = vrot.slane %v334, 7
        %v704 = vrot.slane %v336, 6
        %v705 = vsel %vm398, %v704, %v703
        %v706 = vrot.slane %v338, 5
        %v707 = vsel %vm400, %v706, %v705
        %v709 = vsub.f32 %v702, %v707
        %711 = vset.pattern.permute.xlu0 0
        %712 = vperm.xlu0 %711, %v489
        %v713 = vpop.permute.xlu0 %712
        %v714 = vlaneseq
        %v715 = vshrl.u32 %v714, 7
        %v716 = vsub.s32 %v274, %v715
        %v717 = vrot.slane %v713, %v716
        %720 = vset.pattern.permute.xlu0 0
        %721 = vperm.xlu0 %720, %v599
        %v722 = vpop.permute.xlu0 %721
        %v723 = vadd.s32 %v274, 4294967293
        %v724 = vlaneseq
        %v725 = vshrl.u32 %v724, 7
        %v726 = vsub.s32 %v723, %v725
        %v727 = vrot.slane %v722, %v726
        %730 = vset.pattern.permute.xlu0 0
        %731 = vperm.xlu0 %730, %v709
        %v732 = vpop.permute.xlu0 %731
        %v733 = vadd.s32 %v274, 4294967290
        %v734 = vlaneseq
        %v735 = vshrl.u32 %v734, 7
        %v736 = vsub.s32 %v733, %v735
        %v737 = vrot.slane %v732, %v736
        %v740 = vadd.s32 %v274, 4294967287
        %v741 = vlaneseq
        %v742 = vshrl.u32 %v741, 7
        %v743 = vsub.s32 %v740, %v742
        %v744 = vrot.slane %v479, %v743
        %v747 = vadd.s32 %v274, 4294967284
        %v748 = vlaneseq
        %v749 = vshrl.u32 %v748, 7
        %v750 = vsub.s32 %v747, %v749
        %v751 = vrot.slane %v591, %v750
        %v754 = vadd.s32 %v274, 4294967281
        %v755 = vlaneseq
        %v756 = vshrl.u32 %v755, 7
        %v757 = vsub.s32 %v754, %v756
        %v758 = vrot.slane %v701, %v757
        %v761 = vadd.s32 %v274, 4294967278
        %v762 = vlaneseq
        %v763 = vshrl.u32 %v762, 7
        %v764 = vsub.s32 %v761, %v763
        %v765 = vrot.slane %v480, %v764
        %v768 = vadd.s32 %v274, 4294967275
        %v769 = vlaneseq
        %v770 = vshrl.u32 %v769, 7
        %v771 = vsub.s32 %v768, %v770
        %v772 = vrot.slane %v592, %v771
        %v775 = vadd.s32 %v274, 4294967272
        %v776 = vlaneseq
        %v777 = vshrl.u32 %v776, 7
        %v778 = vsub.s32 %v775, %v777
        %v779 = vrot.slane %v702, %v778
        %vm781 = vcmask 23552
        %v782 = vsel %vm781, %v717, %v727
        %vm783 = vcmask 48128
        %v784 = vsel %vm783, %v782, %v737
        %vm785 = vcmask 72704
        %v786 = vsel %vm785, %v784, %v744
        %vm787 = vcmask 97280
        %v788 = vsel %vm787, %v786, %v751
        %vm789 = vcmask 121856
        %v790 = vsel %vm789, %v788, %v758
        %vm791 = vcmask 146432
        %v792 = vsel %vm791, %v790, %v765
        %vm793 = vcmask 171008
        %v794 = vsel %vm793, %v792, %v772
        %vm795 = vcmask 195584
        %v796 = vsel %vm795, %v794, %v779
        %vm797 = vcmask 220160
        %v799 = vsel %vm797, %v796, 0
        %vm801 = vcmask 1042432
        %v803 = vsel %vm801, %v267, 0
        %805 = vmatprep.subr.mxu0 0.0
        %806 = vmatpush1.msra.mxu0 %v264
        %807 = vmatprep.subr.mxu0 0.0
        %808 = vmatpush1.msra.mxu0 %v265
        %809 = vmatprep.subr.mxu0 0.0
        %810 = vmatpush1.msra.mxu0 %v266
        %811 = vmatprep.subr.mxu0 0.0
        %812 = vmatpush1.msra.mxu0 %v803
        %813 = vmatprep.subr.mxu0 0.0
        %814 = vmatpush1.msra.mxu0 0.0
        %815 = vmatprep.subr.mxu0 0.0
        %816 = vmatpush1.msra.mxu0 0.0
        %817 = vmatprep.subr.mxu0 0.0
        %818 = vmatpush1.msra.mxu0 0.0
        %819 = vmatprep.subr.mxu0 0.0
        %820 = vmatpush1.msra.mxu0 0.0
        %821 = vmatprep.subr.mxu0 0.0
        %822 = vmatpush1.msra.mxu0 0.0
        %823 = vmatprep.subr.mxu0 0.0
        %824 = vmatpush1.msra.mxu0 0.0
        %825 = vmatprep.subr.mxu0 0.0
        %826 = vmatpush1.msra.mxu0 0.0
        %827 = vmatprep.subr.mxu0 0.0
        %828 = vmatpush1.msra.mxu0 0.0
        %829 = vmatprep.subr.mxu0 0.0
        %830 = vmatpush1.msra.mxu0 0.0
        %831 = vmatprep.subr.mxu0 0.0
        %832 = vmatpush1.msra.mxu0 0.0
        %833 = vmatprep.subr.mxu0 0.0
        %834 = vmatpush1.msra.mxu0 0.0
        %835 = vmatprep.subr.mxu0 0.0
        %836 = vmatpush1.msra.mxu0 0.0
        %837 = vmatprep.subr.mxu0 0.0
        %838 = vmatpush1.msra.mxu0 0.0
        %839 = vmatprep.subr.mxu0 0.0
        %840 = vmatpush1.msra.mxu0 0.0
        %841 = vmatprep.subr.mxu0 0.0
        %842 = vmatpush1.msra.mxu0 0.0
        %843 = vmatprep.subr.mxu0 0.0
        %844 = vmatpush1.msra.mxu0 0.0
        %845 = vmatprep.subr.mxu0 0.0
        %846 = vmatpush1.msra.mxu0 0.0
        %847 = vmatprep.subr.mxu0 0.0
        %848 = vmatpush1.msra.mxu0 0.0
        %849 = vmatprep.subr.mxu0 0.0
        %850 = vmatpush1.msra.mxu0 0.0
        %851 = vmatprep.subr.mxu0 0.0
        %852 = vmatpush1.msra.mxu0 0.0
        %853 = vmatprep.subr.mxu0 0.0
        %854 = vmatpush1.msra.mxu0 0.0
        %855 = vmatprep.subr.mxu0 0.0
        %856 = vmatpush1.msra.mxu0 0.0
        %857 = vmatprep.subr.mxu0 0.0
        %858 = vmatpush1.msra.mxu0 0.0
        %859 = vmatprep.subr.mxu0 0.0
        %860 = vmatpush1.msra.mxu0 0.0
        %861 = vmatprep.subr.mxu0 0.0
        %862 = vmatpush1.msra.mxu0 0.0
        %863 = vmatprep.subr.mxu0 0.0
        %864 = vmatpush1.msra.mxu0 0.0
        %865 = vmatprep.subr.mxu0 0.0
        %866 = vmatpush1.msra.mxu0 0.0
        %867 = vmatprep.subr.mxu0 0.0
        %868 = vmatpush1.msra.mxu0 0.0
        %869 = vmatprep.mubr.f32.mxu0 0.0
        %870 = vmatmul.mubr.f32.gmra.mrb[0].mxu0 %v799
        %v871 = vpop.f32.mrb[0].mxu0
        %v872 = vadd.f32 %v268, %v871
        %v873 = vpop.f32.mrb[0].mxu0
        %874 = vdwg.mxu0
        %v876 = vsel %vm795, %v872, 0
        %878 = vmatprep.subr.mxu0 0.0
        %879 = vmatpush1.msra.mxu0 %v269
        %880 = vmatprep.subr.mxu0 0.0
        %881 = vmatpush1.msra.mxu0 %v270
        %882 = vmatprep.subr.mxu0 0.0
        %883 = vmatpush1.msra.mxu0 %v271
        %884 = vmatprep.subr.mxu0 0.0
        %885 = vmatpush1.msra.mxu0 0.0
        %886 = vmatprep.subr.mxu0 0.0
        %887 = vmatpush1.msra.mxu0 0.0
        %888 = vmatprep.subr.mxu0 0.0
        %889 = vmatpush1.msra.mxu0 0.0
        %890 = vmatprep.subr.mxu0 0.0
        %891 = vmatpush1.msra.mxu0 0.0
        %892 = vmatprep.subr.mxu0 0.0
        %893 = vmatpush1.msra.mxu0 0.0
        %894 = vmatprep.subr.mxu0 0.0
        %895 = vmatpush1.msra.mxu0 0.0
        %896 = vmatprep.subr.mxu0 0.0
        %897 = vmatpush1.msra.mxu0 0.0
        %898 = vmatprep.subr.mxu0 0.0
        %899 = vmatpush1.msra.mxu0 0.0
        %900 = vmatprep.subr.mxu0 0.0
        %901 = vmatpush1.msra.mxu0 0.0
        %902 = vmatprep.subr.mxu0 0.0
        %903 = vmatpush1.msra.mxu0 0.0
        %904 = vmatprep.subr.mxu0 0.0
        %905 = vmatpush1.msra.mxu0 0.0
        %906 = vmatprep.subr.mxu0 0.0
        %907 = vmatpush1.msra.mxu0 0.0
        %908 = vmatprep.subr.mxu0 0.0
        %909 = vmatpush1.msra.mxu0 0.0
        %910 = vmatprep.subr.mxu0 0.0
        %911 = vmatpush1.msra.mxu0 0.0
        %912 = vmatprep.subr.mxu0 0.0
        %913 = vmatpush1.msra.mxu0 0.0
        %914 = vmatprep.subr.mxu0 0.0
        %915 = vmatpush1.msra.mxu0 0.0
        %916 = vmatprep.subr.mxu0 0.0
        %917 = vmatpush1.msra.mxu0 0.0
        %918 = vmatprep.subr.mxu0 0.0
        %919 = vmatpush1.msra.mxu0 0.0
        %920 = vmatprep.subr.mxu0 0.0
        %921 = vmatpush1.msra.mxu0 0.0
        %922 = vmatprep.subr.mxu0 0.0
        %923 = vmatpush1.msra.mxu0 0.0
        %924 = vmatprep.subr.mxu0 0.0
        %925 = vmatpush1.msra.mxu0 0.0
        %926 = vmatprep.subr.mxu0 0.0
        %927 = vmatpush1.msra.mxu0 0.0
        %928 = vmatprep.subr.mxu0 0.0
        %929 = vmatpush1.msra.mxu0 0.0
        %930 = vmatprep.subr.mxu0 0.0
        %931 = vmatpush1.msra.mxu0 0.0
        %932 = vmatprep.subr.mxu0 0.0
        %933 = vmatpush1.msra.mxu0 0.0
        %934 = vmatprep.subr.mxu0 0.0
        %935 = vmatpush1.msra.mxu0 0.0
        %936 = vmatprep.subr.mxu0 0.0
        %937 = vmatpush1.msra.mxu0 0.0
        %938 = vmatprep.subr.mxu0 0.0
        %939 = vmatpush1.msra.mxu0 0.0
        %940 = vmatprep.subr.mxu0 0.0
        %941 = vmatpush1.msra.mxu0 0.0
        %942 = vmatprep.mubr.f32.mxu0 0.0
        %943 = vmatmul.mubr.f32.gmra.mrb[0].mxu0 %v876
        %v944 = vpop.f32.mrb[0].mxu0
        %v945 = vadd.f32 %v272, %v944
        %v946 = vpop.f32.mrb[0].mxu0
        %947 = vdwg.mxu0
        %vm948 = vcmask 90112
        %v949 = vsel %vm948, %v945, -inf
        %950 = vmax.xlane.f32.xlu0 %v949
        %v951 = vpop.xlane.xlu0 %950
        %v952 = vsub.f32 %v945, %v951
        %v953 = vmul.f32 %v952, 1.442695
        %v954 = vpow.pop %v953
        %v955 = vsel %vm948, %v954, 0.0
        %956 = vadd.xlane.f32.xlu0 %v955
        %v957 = vpop.xlane.xlu0 %956
        %v958 = vrcp.pop %v957
        %v959 = vmul.f32 %v954, %v958
        %960 = vst.msk [vmem:[%s244] sm:$0x1] %vm948, %v959
        %vm961 = vcmp.eq.f32.partialorder %v945, %v951
        %v962 = vsel %vm961, %v274, 12
        %v963 = vsel %vm948, %v962, 2147483647
        %v964 = vand.u32 %v963, 65535
        %v965 = vshra.s32 %v963, 16
        %v966 = vcvt.s32.f32 %v964
        %v967 = vcvt.s32.f32 %v965
        %968 = vmin.xlane.f32.xlu0 %v967
        %v969 = vpop.xlane.xlu0 %968
        %vm970 = vcmp.eq.f32.partialorder %v967, %v969
        %v971 = vsel %vm970, %v966, inf
        %972 = vmin.xlane.f32.xlu0 %v971
        %v973 = vpop.xlane.xlu0 %972
        %v974 = vcvt.f32.s32 %v973
        %v975 = vcvt.f32.s32 %v969
        %v976 = vshll.u32 %v975, 16
        %v977 = vadd.s32 %v976, %v974
        %vm978 = vcmask 0
        %979 = vst.msk [vmem:[%s257] sm:$0x1] %vm978, %v977
        %s980 = sand.u32 %s139, 1
        %s981 = scalar_lea.sflag [#allocation3], %s980
        %s982 = sand.u32 %s139, 1
        %s983 = scalar_lea.vmem [#allocation2], %s982
        %p984 = scmp.lt.s32.totalorder %s21, 1
        %s985 = scalar_select %p984, %s21, 1
        %s986 = scalar_lea.vmem %s6, %s985
        // Predicated region
        $region41: #{tpu_custom_call.1} parent=39 // pred_check
          %p987 = pneg %p149
        $region42: #{tpu_custom_call.1} parent=39 // pred_check_branch
          %989 = sbr.rel (%p987) target = $region44
        $region43: #{tpu_custom_call.1} parent=39 // pred_region
          %s991 = ssub.s32 16, 16
          %992 = vsyncadd %s981, %s991
          %s993 = smul.addr %s21, 16
          %s994 = scalar_lea.hbm %s5, %s993
          %s996 = sshll.u32 %s983, 4
          %s997 = int_to_ptr.vmem [resolvable:$true] %s996
          %999 = dma.vmem_to_hbm [thread:$0]  %s997, 16, %s994, %s981
        $region44: #{tpu_custom_call.1} parent=39 // pred_fallthru
          _
        // Predicated region
        $region45: #{tpu_custom_call.1} parent=39 // pred_check
          %p1000 = pneg %p175
        $region46: #{tpu_custom_call.1} parent=39 // pred_check_branch
          %1002 = sbr.rel (%p1000) target = $region48
        $region47: #{tpu_custom_call.1} parent=39 // pred_region
          _
        $region48: #{tpu_custom_call.1} parent=39 // pred_fallthru
          _
      $region40: #{tpu_custom_call.1} parent=5 // pred_fallthru
        _
      %p1003 = scmp.le.s32.totalorder 2, %s16
      // Predicated region
      $region49: #{tpu_custom_call.1} parent=5 // pred_check
        %p1004 = pneg %p1003
      $region50: #{tpu_custom_call.1} parent=5 // pred_check_branch
        %1006 = sbr.rel (%p1004) target = $region52
      $region51: #{tpu_custom_call.1} parent=5 // pred_region
        %s1007 = ssub.s32 %s16, 2
        // Predicated region
        $region53: #{tpu_custom_call.1} parent=51 // pred_check
          %p1008 = pneg %p155
        $region54: #{tpu_custom_call.1} parent=51 // pred_check_branch
          %1010 = sbr.rel (%p1008) target = $region56
        $region55: #{tpu_custom_call.1} parent=51 // pred_region
          %s1011 = sand.u32 %s140, 1
          %s1012 = scalar_lea.sflag [#allocation3], %s1011
          %s1013 = sand.u32 %s140, 1
          %s1014 = scalar_lea.vmem [#allocation2], %s1013
          %1015 = dma.done %s1012, 16
        $region56: #{tpu_custom_call.1} parent=51 // pred_fallthru
          _
        // Predicated region
        $region57: #{tpu_custom_call.1} parent=51 // pred_check
          %p1016 = pneg %p181
        $region58: #{tpu_custom_call.1} parent=51 // pred_check_branch
          %1018 = sbr.rel (%p1016) target = $region60
        $region59: #{tpu_custom_call.1} parent=51 // pred_region
          %p1019 = scmp.lt.s32.totalorder %s22, 1
          %s1020 = scalar_select %p1019, %s22, 1
          %s1021 = scalar_lea.vmem %s6, %s1020
        $region60: #{tpu_custom_call.1} parent=51 // pred_fallthru
          _
      $region52: #{tpu_custom_call.1} parent=5 // pred_fallthru
        _
    $region6: #{tpu_custom_call.1} parent=1 // loop_footer
      %s20 = sadd.s32 1, %s16
    $region7: #{tpu_custom_call.1} parent=1 // loop_footer_branch
      %15 = sbr.rel target = $region3
    $region8: #{tpu_custom_call.1} parent=1 // loop_exit
      _
    %1022 = vsyncpa [#allocation3], 1
    %s1023 = scalar_lea.sflag [#allocation3], 1
    %1024 = vsyncpa %s1023, 1

</llo_original>
